<compile_context>
chip_gen: v6e
topology: v6e:2x2x1
jax: 0.10.0
libtpu: 0.0.40
codegen_flags: <defaults>
</compile_context>

<pallas_src>
import functools

import jax
import jax.numpy as jnp
from jax import lax
from jax.experimental import pallas as pl
from jax.experimental.pallas import tpu as pltpu

EPS = 1e-8


def _round_up(x, m):
    return -(-x // m) * m


# -----------------------------------------------------------------------------
# Kernels
# -----------------------------------------------------------------------------
def _question_fc_kernel(q_ref, w_ref, b_ref, o_ref):
    """fa_txt tile: ReLU(Q @ W_q[:, h-tile] + b_q[h-tile]) for the whole batch."""
    o_ref[...] = jnp.maximum(
        jnp.dot(q_ref[...], w_ref[...], preferred_element_type=jnp.float32)
        + b_ref[...], 0.0).astype(o_ref.dtype)


def _topdown_attention_kernel(img_ref,    # (bb*Lp, D_img)  matmul dtype (bf16)
                              faq_ref,    # (bb, tH)        f32  precomputed fa_txt tile
                              locs_ref,   # (bb, 1)         int32
                              w_img_ref,  # (D_img, tH)     matmul dtype
                              b_img_ref,  # (1, tH)         f32
                              w_t_ref,    # (tH, A)         matmul dtype
                              b_t_ref,    # (1, A)          f32
                              out_ref,    # (bb, Lp, A)     f32
                              acc_ref,    # (bb*Lp, A)      f32 logit accumulator
                              *, n_loc):
    h = pl.program_id(1)
    n_h = pl.num_programs(1)
    rows = img_ref.shape[0]
    bb, th = faq_ref.shape
    lp = rows // bb
    n_att = w_t_ref.shape[1]

    @pl.when(h == 0)
    def _init():
        acc_ref[...] = jnp.zeros_like(acc_ref)

    # image branch for this H tile: one (bb*Lp, D_img) x (D_img, tH) MXU matmul,
    # f32 accumulation, f32 bias + ReLU.
    fa_img = jnp.maximum(
        jnp.dot(img_ref[...], w_img_ref[...], preferred_element_type=jnp.float32)
        + b_img_ref[...], 0.0)                                    # (bb*Lp, tH) f32

    # combination (non_linear_element_multiply): broadcast fa_txt over locations.
    # Lp is a multiple of 8, so these (bb*Lp, tH) <-> (bb, Lp, tH) views are
    # sublane-tile aligned (no relayout copies).
    joint = (fa_img.reshape(bb, lp, th) * faq_ref[...][:, None, :]).reshape(rows, th)

    # transform: accumulate this H tile's contribution to the attention logits
    # (K-tiled together with the image-branch matmul).
    acc_ref[...] += jnp.dot(joint.astype(w_t_ref.dtype), w_t_ref[...],
                            preferred_element_type=jnp.float32)

    @pl.when(h == n_h - 1)
    def _finalize():
        raw = (acc_ref[...] + b_t_ref[...]).reshape(bb, lp, n_att)   # (bb, Lp, A)
        l_ids = lax.broadcasted_iota(jnp.int32, (bb, lp, n_att), 1)
        if n_loc < lp:
            # padded locations (l >= original num_loc) are excluded from the
            # softmax denominator by sending their logits to -inf.
            raw = jnp.where(l_ids < n_loc, raw, -jnp.inf)

        # fused softmax(dim=loc) + location mask + renormalization:
        #   ref:   attn = e/z ; masked = mask*attn ; s' = sum(masked)
        #          out  = masked / (s' + (s'==0) + EPS)
        #   fused (the 1/z cancels):
        #          out  = masked_e / (s + z*((s==0) + EPS)),  s = sum(masked_e)
        m = jnp.max(raw, axis=1, keepdims=True)                   # (bb, 1, A)
        e = jnp.exp(raw - m)                                      # 0 at padded locs
        z = jnp.sum(e, axis=1, keepdims=True)                     # softmax denominator
        locs = locs_ref[...][:, :, None]                          # (bb, 1, 1) int32
        masked_e = jnp.where(l_ids < locs, e, 0.0)
        s = jnp.sum(masked_e, axis=1, keepdims=True)
        denom = s + z * ((s == 0.0).astype(jnp.float32) + EPS)
        out_ref[...] = (masked_e * (1.0 / denom)).astype(out_ref.dtype)


# -----------------------------------------------------------------------------
# Sizing helpers (generation-aware)
# -----------------------------------------------------------------------------
def _device_info():
    """Returns (mxu_row_target, two_tensorcores_per_chip, vmem_capacity_bytes)."""
    row_target, two_tc = 512, False
    try:
        kind = jax.devices()[0].device_kind.lower()
    except Exception:
        kind = ""
    if "v5 lite" in kind or "v5e" in kind or "v5litepod" in kind:
        row_target = 256          # 4x128x128 MXU: ~256 LHS rows already saturate it
    if "v7" in kind or "tpu7" in kind or "7x" in kind:
        two_tc = True             # v7x: 2 TensorCores per chip share the grid
    try:
        vmem_cap = int(pltpu.get_tpu_info().vmem_capacity_bytes)
    except Exception:
        vmem_cap = 64 * 1024 * 1024   # conservative fallback (v7x per-core VMEM)
    return row_target, two_tc, vmem_cap


def _main_kernel_vmem_bytes(bb, l_pad, d_img, t_h, n_att, mm_bytes):
    rows = bb * l_pad
    total = 0
    total += 2 * rows * d_img * mm_bytes      # image block (double-buffered)
    total += 2 * bb * t_h * 4                 # fa_txt tile
    total += 2 * d_img * t_h * mm_bytes       # w_img tile
    total += 2 * t_h * 4                      # b_img tile
    total += 2 * t_h * n_att * mm_bytes       # w_t tile
    total += 2 * rows * n_att * 4             # output block
    total += rows * n_att * 4                 # logit accumulator scratch
    total += 2 * rows * t_h * 4               # fa_img + joint intermediates
    return total


def _qfc_vmem_bytes(b_pad, d_q, t_h, mm_bytes):
    return (2 * b_pad * d_q * mm_bytes + 2 * d_q * t_h * mm_bytes
            + 2 * t_h * 4 + 2 * b_pad * t_h * 4)


def _vmem_limit(estimate_bytes, vmem_cap):
    return int(min(max(2 * estimate_bytes + (8 << 20), 32 << 20), int(vmem_cap * 0.9)))


def _choose_block_b(batch, l_pad, d_img, t_h, n_att, mm_bytes,
                    row_target, two_tc, vmem_cap, block_b=None):
    budget = int(vmem_cap * 0.7)

    def fits(b):
        return _main_kernel_vmem_bytes(b, l_pad, d_img, t_h, n_att, mm_bytes) <= budget

    if block_b is not None:
        bb = max(1, min(block_b, batch))
    else:
        # Fill the MXU M dimension (~256 rows on v5e, ~512 on v6e/v7x) per block.
        bb = max(1, min(batch, -(-row_target // l_pad)))
        if two_tc and -(-batch // bb) < 4:
            # v7x megacore: prefer >= 4 grid steps (>= 2 blocks per core), but only
            # when each block still feeds >= 256 rows to the MXU; else do not split.
            cand = -(-batch // 4)
            if cand * l_pad >= 256:
                bb = min(bb, cand)

    # A block that does not cover the whole batch must have bb % 8 == 0 so the
    # (bb, tH) / (bb, 1) second-minor block dims respect the (8, 128) tiling rule.
    if bb < batch:
        bb = min(batch, _round_up(bb, 8))
    if not fits(bb) and batch > 8:
        b = max(8, (min(bb, batch - 1) // 8) * 8)
        while b > 8 and not fits(b):
            b -= 8
        bb = b
    return max(1, min(bb, batch))


# -----------------------------------------------------------------------------
# Wrapper
# -----------------------------------------------------------------------------
def topdown_attention(image_feat, question_embedding, image_locs, params,
                      *, tile_h=None, block_b=None, matmul_dtype=jnp.bfloat16):
    """Pythia TopDownAttention forward (softmax normalization branch).

    image_feat:         (B, L, D_img) float
    question_embedding: (B, 1, D_q)   float
    image_locs:         (B,)          int   (number of valid locations per sample)
    params: w_img (D_img,H), b_img (1,H), w_q (D_q,H), b_q (1,H), w_t (H,A), b_t (1,A)
    Returns (B, L, A) float32 masked, renormalized attention.
    """
    B, L, D_img = image_feat.shape
    D_q = question_embedding.shape[-1]
    H = params["w_img"].shape[1]
    A = params["w_t"].shape[1]
    mm_bytes = jnp.dtype(matmul_dtype).itemsize

    row_target, two_tc, vmem_cap = _device_info()

    # ---- H ("hidden") tiling: resident weights / intermediates become O(tH) ----
    if tile_h is None:
        tile_h = 512
    if tile_h >= H:
        t_h, h_pad = H, H
    else:
        t_h = _round_up(tile_h, 128)               # lane-aligned streamed weight tiles
        if t_h >= H:
            t_h, h_pad = H, H
        else:
            h_pad = _round_up(H, t_h)
    n_h = h_pad // t_h

    # ---- location padding: L -> multiple of 8 keeps in-kernel 2D/3D views aligned ----
    l_pad = _round_up(L, 8)

    bb = _choose_block_b(B, l_pad, D_img, t_h, A, mm_bytes,
                         row_target, two_tc, vmem_cap, block_b)
    n_blocks = -(-B // bb)
    b_pad = n_blocks * bb

    # ---- pad / flatten / cast inputs (matmul operands to bf16, the rest f32) ----
    img = image_feat.astype(jnp.float32)
    if (b_pad, l_pad) != (B, L):
        img = jnp.pad(img, ((0, b_pad - B), (0, l_pad - L), (0, 0)))
    img2d = img.reshape(b_pad * l_pad, D_img).astype(matmul_dtype)

    q2d = question_embedding.reshape(B, D_q)
    locs = image_locs.astype(jnp.int32)
    if b_pad != B:
        q2d = jnp.pad(q2d, ((0, b_pad - B), (0, 0)))
        # padded batch rows get image_locs = 0 -> fully masked -> zero output rows,
        # which are sliced off below (denominator stays > 0, no NaN/Inf).
        locs = jnp.pad(locs, (0, b_pad - B))
    q2d = q2d.astype(matmul_dtype)
    locs2 = locs.reshape(b_pad, 1)

    def pad_h(x, axis):
        if h_pad == H:
            return x
        widths = [(0, 0)] * x.ndim
        widths[axis] = (0, h_pad - H)
        return jnp.pad(x, widths)                  # zero padding: exact (0 contributions)

    w_img = pad_h(params["w_img"].astype(matmul_dtype), 1)
    b_img = pad_h(params["b_img"].astype(jnp.float32).reshape(1, H), 1)
    w_q = pad_h(params["w_q"].astype(matmul_dtype), 1)
    b_q = pad_h(params["b_q"].astype(jnp.float32).reshape(1, H), 1)
    w_t = pad_h(params["w_t"].astype(matmul_dtype), 0)
    b_t = params["b_t"].astype(jnp.float32).reshape(1, A)

    # ---- question branch, hoisted out of the per-block grid, H-tiled ----
    fa_q = pl.pallas_call(
        _question_fc_kernel,
        out_shape=jax.ShapeDtypeStruct((b_pad, h_pad), jnp.float32),
        grid_spec=pltpu.PrefetchScalarGridSpec(
            num_scalar_prefetch=0,
            grid=(n_h,),
            in_specs=[
                pl.BlockSpec((b_pad, D_q), lambda h: (0, 0)),
                pl.BlockSpec((D_q, t_h), lambda h: (0, h)),
                pl.BlockSpec((1, t_h), lambda h: (0, h)),
            ],
            out_specs=pl.BlockSpec((b_pad, t_h), lambda h: (0, h)),
        ),
        compiler_params=pltpu.CompilerParams(
            dimension_semantics=("parallel",),
            vmem_limit_bytes=_vmem_limit(_qfc_vmem_bytes(b_pad, D_q, t_h, mm_bytes),
                                         vmem_cap),
        ),
    )(q2d, w_q, b_q)

    # ---- main kernel: batch-blocked (parallel) x H-tiled (arbitrary) grid ----
    est = _main_kernel_vmem_bytes(bb, l_pad, D_img, t_h, A, mm_bytes)
    out = pl.pallas_call(
        functools.partial(_topdown_attention_kernel, n_loc=L),
        out_shape=jax.ShapeDtypeStruct((b_pad, l_pad, A), jnp.float32),
        grid_spec=pltpu.PrefetchScalarGridSpec(
            num_scalar_prefetch=0,
            grid=(n_blocks, n_h),                  # reduction (H) axis innermost
            in_specs=[
                pl.BlockSpec((bb * l_pad, D_img), lambda i, h: (i, 0)),  # img (h-const)
                pl.BlockSpec((bb, t_h), lambda i, h: (i, h)),            # fa_txt tile
                pl.BlockSpec((bb, 1), lambda i, h: (i, 0)),              # image_locs
                pl.BlockSpec((D_img, t_h), lambda i, h: (0, h)),         # w_img tile
                pl.BlockSpec((1, t_h), lambda i, h: (0, h)),             # b_img tile
                pl.BlockSpec((t_h, A), lambda i, h: (h, 0)),             # w_t tile
                pl.BlockSpec((1, A), lambda i, h: (0, 0)),               # b_t
            ],
            out_specs=pl.BlockSpec((bb, l_pad, A), lambda i, h: (i, 0, 0)),
            scratch_shapes=[pltpu.VMEM((bb * l_pad, A), jnp.float32)],
        ),
        compiler_params=pltpu.CompilerParams(
            dimension_semantics=("parallel", "arbitrary"),
            vmem_limit_bytes=_vmem_limit(est, vmem_cap),
        ),
    )(img2d, fa_q, locs2, w_img, b_img, w_t, b_t)

    return out[:B, :L]


# -----------------------------------------------------------------------------
# Pure-JAX reference (mirrors the kernel's mixed precision when matmul_dtype=bf16)
# -----------------------------------------------------------------------------
def reference(image_feat, question_embedding, image_locs, params,
              matmul_dtype=jnp.bfloat16):
    def mm(a, b):
        return jnp.dot(a.astype(matmul_dtype), b.astype(matmul_dtype),
                       preferred_element_type=jnp.float32)

    fa_img = jax.nn.relu(mm(image_feat, params["w_img"]) + params["b_img"])
    fa_q = jax.nn.relu(mm(question_embedding, params["w_q"]) + params["b_q"])
    joint = fa_img * fa_q                         # (B, L, H) * (B, 1, H)
    raw = mm(joint, params["w_t"]) + params["b_t"]
    attn = jax.nn.softmax(raw, axis=1)
    num_loc = image_feat.shape[1]
    ids = jnp.arange(num_loc)[None, :, None]
    masked = jnp.where(ids >= image_locs[:, None, None], 0.0, attn)
    s = jnp.sum(masked, axis=1, keepdims=True)
    s = s + (s == 0.0).astype(jnp.float32) + EPS
    return masked / s


if __name__ == "__main__":
    # Small shapes that still exercise every code path:
    #   B=20 with block_b=8   -> 3 batch blocks, 4 padded batch rows
    #   L=12                  -> padded to L_pad=16 (padded-location masking path)
    #   H=256 with tile_h=128 -> 2 H tiles (accumulator init / finalize path)
    #   image_locs includes 0 (zero-sum guard) and L (nothing masked)
    B, L, D_img, D_q, H, A = 20, 12, 48, 40, 256, 2

    key = jax.random.PRNGKey(0)
    keys = jax.random.split(key, 9)
    image_feat = jax.random.normal(keys[0], (B, L, D_img), jnp.float32)
    question_embedding = jax.random.normal(keys[1], (B, 1, D_q), jnp.float32)
    image_locs = jax.random.randint(keys[2], (B,), 1, L + 1).astype(jnp.int32)
    image_locs = image_locs.at[0].set(0).at[1].set(L)

    params = {
        "w_img": jax.random.normal(keys[3], (D_img, H), jnp.float32) * 0.1,
        "b_img": jax.random.normal(keys[4], (1, H), jnp.float32) * 0.01,
        "w_q": jax.random.normal(keys[5], (D_q, H), jnp.float32) * 0.1,
        "b_q": jax.random.normal(keys[6], (1, H), jnp.float32) * 0.01,
        "w_t": jax.random.normal(keys[7], (H, A), jnp.float32) * 0.1,
        "b_t": jax.random.normal(keys[8], (1, A), jnp.float32) * 0.01,
    }

    out = topdown_attention(image_feat, question_embedding, image_locs, params,
                            tile_h=128, block_b=8)
    out = jax.block_until_ready(out)
    assert out.shape == (B, L, A)

    # reference with matching mixed precision (bf16 matmul operands, f32 accumulation)
    ref = reference(image_feat, question_embedding, image_locs, params)
    assert jnp.allclose(out, ref, atol=2e-4, rtol=1e-3), "mismatch vs JAX reference"

    # loose sanity check against a pure-f32 reference (bounds the bf16 matmul error)
    ref32 = reference(image_feat, question_embedding, image_locs, params,
                      matmul_dtype=jnp.float32)
    assert jnp.allclose(out, ref32, atol=5e-2, rtol=5e-2), "mismatch vs f32 reference"

    print("KERNEL_OK")
</pallas_src>

<mosaic_0001>
module attributes {stable_mosaic.version = 11 : i64} {
  func.func @_question_fc_kernel(%arg0: i32, %arg1: memref<24x40xbf16, #tpu.memory_space<vmem>>, %arg2: memref<40x128xbf16, #tpu.memory_space<vmem>>, %arg3: memref<1x128xf32, #tpu.memory_space<vmem>>, %arg4: memref<24x128xf32, #tpu.memory_space<vmem>>) attributes {dimension_semantics = [#tpu.dimension_semantics<parallel>], iteration_bounds = array<i64: 2>, scalar_prefetch = 0 : i64, scratch_operands = 0 : i64, tpu.core_type = #tpu.core_type<tc>, window_params = [{pipeline_mode = #tpu.pipeline_mode<synchronous>, transform_indices = @transform_0, window_bounds = array<i64: 24, 40>}, {transform_indices = @transform_1, window_bounds = array<i64: 40, 128>}, {transform_indices = @transform_2, window_bounds = array<i64: 1, 128>}, {transform_indices = @transform_3, window_bounds = array<i64: 24, 128>}]} {
    %c0 = arith.constant 0 : index
    %c0_0 = arith.constant 0 : index
    %0 = vector.load %arg1[%c0, %c0_0] : memref<24x40xbf16, #tpu.memory_space<vmem>>, vector<24x40xbf16>
    %c0_1 = arith.constant 0 : index
    %c0_2 = arith.constant 0 : index
    %1 = vector.load %arg2[%c0_1, %c0_2] : memref<40x128xbf16, #tpu.memory_space<vmem>>, vector<40x128xbf16>
    %cst = arith.constant dense<0.000000e+00> : vector<24x128xf32>
    %2 = tpu.matmul %0, %1, %cst {dimension_numbers = #tpu.dot_dimension_numbers<[1], [0], [0], [1], [0, 0, 1, 1], [], []>} : vector<24x40xbf16>, vector<40x128xbf16>, vector<24x128xf32> -> vector<24x128xf32>
    %c0_3 = arith.constant 0 : index
    %c0_4 = arith.constant 0 : index
    %3 = vector.load %arg3[%c0_3, %c0_4] : memref<1x128xf32, #tpu.memory_space<vmem>>, vector<1x128xf32>
    %4 = vector.broadcast %3 : vector<1x128xf32> to vector<24x128xf32>
    %5 = arith.addf %2, %4 : vector<24x128xf32>
    %cst_5 = arith.constant 0.000000e+00 : f32
    %6 = vector.broadcast %cst_5 : f32 to vector<24x128xf32>
    %7 = arith.maximumf %5, %6 : vector<24x128xf32>
    %c0_6 = arith.constant 0 : index
    %c0_7 = arith.constant 0 : index
    %8 = vector.load %arg4[%c0_6, %c0_7] : memref<24x128xf32, #tpu.memory_space<vmem>>, vector<24x128xf32>
    tpu.vector_store %arg4[%c0_6, %c0_7], %7 {strides = array<i32>} : memref<24x128xf32, #tpu.memory_space<vmem>>, vector<24x128xf32>,
    return
  }
  func.func @transform_0(%arg0: i32) -> (i32, i32) {
    %c0_i32 = arith.constant 0 : i32
    %c0_i32_0 = arith.constant 0 : i32
    %c0_i32_1 = arith.constant 0 : i32
    return %c0_i32, %c0_i32_0 : i32, i32
  }
  func.func @transform_1(%arg0: i32) -> (i32, i32) {
    %c0_i32 = arith.constant 0 : i32
    %c0_i32_0 = arith.constant 0 : i32
    return %c0_i32, %arg0 : i32, i32
  }
  func.func @transform_2(%arg0: i32) -> (i32, i32) {
    %c0_i32 = arith.constant 0 : i32
    %c0_i32_0 = arith.constant 0 : i32
    return %c0_i32, %arg0 : i32, i32
  }
  func.func @transform_3(%arg0: i32) -> (i32, i32) {
    %c0_i32 = arith.constant 0 : i32
    %c0_i32_0 = arith.constant 0 : i32
    return %c0_i32, %arg0 : i32, i32
  }
}

</mosaic_0001>

<llo_original>
// kernel: tpu_custom_call.1
$region0: #{tpu_custom_call.1}
  #allocation0 [shape = 'u32[]', space=smem, size = 0x4, offset = 0x4, fixed_abs, tag = 'smem constant byte address 0x4 - core index']
  #allocation1 [shape = 'u32[144,128]{1,0:T(1,128)}', space=vmem, size = 0x12000, scoped, tag = 'internal scratch']
  %s0 = inlined_call_operand.hbm [shape: bf16[24,40], index: 0, kind: input, shape index: {}]
  %s1 = inlined_call_operand.hbm [shape: bf16[40,256], index: 1, kind: input, shape index: {}]
  %s2 = inlined_call_operand.vmem [shape: f32[1,256], index: 2, kind: input, shape index: {}]
  %s3 = inlined_call_operand.hbm [shape: f32[24,256], index: 3, kind: output, shape index: {}]
  %s4 = sld [smem:[#allocation0]]
  $region53: #{tpu_custom_call.1} parent=0
    _
  %s6 = ssub.s32 1, %s4
  %s7 = scalar_select 0, %s6, %s4
  $region1: #{tpu_custom_call.1} parent=0
    #allocation2 [shape = 'u8[6144]{0}', space=vmem, size = 0x1800, scoped, tag = 'input window, operand 0, single buffered']
    #allocation3 [shape = 's32[2]{0}', space=sflag, size = 0x8, scoped, tag = 'scoped memory for tpu_custom_call.1']
    #allocation4 [shape = 's32[2]{0}', space=sflag, size = 0x8, scoped, tag = 'scoped memory for tpu_custom_call.1']
    #allocation5 [shape = 'u8[20480]{0}', space=vmem, size = 0x5000, scoped, tag = 'input window, operand 1']
    #allocation6 [shape = 's32[2]{0}', space=sflag, size = 0x8, scoped, tag = 'scoped memory for tpu_custom_call.1']
    #allocation7 [shape = 'u8[24576]{0}', space=vmem, size = 0x6000, scoped, tag = 'output window, operand 0']
    %8 = vsyncpa [#allocation3], 0
    %9 = vsyncpa [#allocation6], 0
    %s10 = scalar_lea.sflag [#allocation6], 1
    %11 = vsyncpa %s10, 0
    %12 = vsyncpa [#allocation4], 0
    %s13 = scalar_lea.sflag [#allocation4], 1
    %14 = vsyncpa %s13, 0
    loop: start=0, step=1, limit=4
    $region2: #{tpu_custom_call.1} parent=1 // loop_pre_header
      _
    $region3: #{tpu_custom_call.1} parent=1 // loop_header
      %s16 = sphi 0, %s20
      %p17 = scmp.ge.s32.totalorder %s16, 4
      %s24 = sphi 0, %s24
      %s26 = sphi 0, %s24
      %s27 = sphi 0, %s26
      %s41 = sphi 0, %s27
      %s47 = sphi 0, %s49
      %s50 = sphi 0, %s47
      %s51 = sphi 0, %s50
      %s67 = sphi 0, %s51
      %s73 = sphi 0, %s75
      %s76 = sphi 0, %s73
      %s77 = sphi 0, %s76
      %s93 = sphi 0, %s77
      %s99 = sphi 0, %s101
      %s102 = sphi 0, %s99
      %s103 = sphi 0, %s102
      %s119 = sphi 0, %s103
    $region4: #{tpu_custom_call.1} parent=1 // loop_header_branch
      %19 = sbr.rel (%p17) target = $region8
    $region5: #{tpu_custom_call.1} parent=1 // loop_body
      %s21 = ssub.s32 %s16, 1
      %s22 = ssub.s32 %s16, 2
      %s23 = sadd.s32 %s16, 1
      %s25 = sadd.s32 %s24, 1
      %p28 = scmp.eq.s32.totalorder %s16, 1
      %p29 = scmp.ne.s32.totalorder %s24, %s26
      %p30 = scmp.eq.s32.totalorder %s16, 0
      %p31 = por %p29, %p30
      %p32 = scmp.ne.s32.totalorder %s24, %s26
      %p33 = scmp.eq.s32.totalorder %s21, 1
      %p34 = por %p32, %p33
      %p35 = scmp.ne.s32.totalorder %s26, %s27
      %p36 = scmp.eq.s32.totalorder %s21, 0
      %p37 = por %p35, %p36
      %p38 = scmp.ne.s32.totalorder %s26, %s27
      %p39 = scmp.eq.s32.totalorder %s22, 1
      %p40 = por %p38, %p39
      %p42 = scmp.ne.s32.totalorder %s27, %s41
      %p43 = scmp.eq.s32.totalorder %s22, 0
      %p44 = por %p42, %p43
      %s45 = ssub.s32 %s16, %s23
      %p46 = scmp.eq.s32.totalorder %s45, 0
      %s48 = sadd.s32 %s47, 1
      %s49 = scalar_select %p46, %s47, %s48
      %p52 = pneg %p46
      %p53 = scmp.eq.s32.totalorder %s16, 1
      %p54 = por %p52, %p53
      %p55 = scmp.ne.s32.totalorder %s47, %s50
      %p56 = scmp.eq.s32.totalorder %s16, 0
      %p57 = por %p55, %p56
      %p58 = scmp.ne.s32.totalorder %s47, %s50
      %p59 = scmp.eq.s32.totalorder %s21, 1
      %p60 = por %p58, %p59
      %p61 = scmp.ne.s32.totalorder %s50, %s51
      %p62 = scmp.eq.s32.totalorder %s21, 0
      %p63 = por %p61, %p62
      %p64 = scmp.ne.s32.totalorder %s50, %s51
      %p65 = scmp.eq.s32.totalorder %s22, 1
      %p66 = por %p64, %p65
      %p68 = scmp.ne.s32.totalorder %s51, %s67
      %p69 = scmp.eq.s32.totalorder %s22, 0
      %p70 = por %p68, %p69
      %s71 = ssub.s32 %s16, %s23
      %p72 = scmp.eq.s32.totalorder %s71, 0
      %s74 = sadd.s32 %s73, 1
      %s75 = scalar_select %p72, %s73, %s74
      %p78 = pneg %p72
      %p79 = scmp.eq.s32.totalorder %s16, 1
      %p80 = por %p78, %p79
      %p81 = scmp.ne.s32.totalorder %s73, %s76
      %p82 = scmp.eq.s32.totalorder %s16, 0
      %p83 = por %p81, %p82
      %p84 = scmp.ne.s32.totalorder %s73, %s76
      %p85 = scmp.eq.s32.totalorder %s21, 1
      %p86 = por %p84, %p85
      %p87 = scmp.ne.s32.totalorder %s76, %s77
      %p88 = scmp.eq.s32.totalorder %s21, 0
      %p89 = por %p87, %p88
      %p90 = scmp.ne.s32.totalorder %s76, %s77
      %p91 = scmp.eq.s32.totalorder %s22, 1
      %p92 = por %p90, %p91
      %p94 = scmp.ne.s32.totalorder %s77, %s93
      %p95 = scmp.eq.s32.totalorder %s22, 0
      %p96 = por %p94, %p95
      %s97 = ssub.s32 %s16, %s23
      %p98 = scmp.eq.s32.totalorder %s97, 0
      %s100 = sadd.s32 %s99, 1
      %s101 = scalar_select %p98, %s99, %s100
      %p104 = pneg %p98
      %p105 = scmp.eq.s32.totalorder %s16, 1
      %p106 = por %p104, %p105
      %p107 = scmp.ne.s32.totalorder %s99, %s102
      %p108 = scmp.eq.s32.totalorder %s16, 0
      %p109 = por %p107, %p108
      %p110 = scmp.ne.s32.totalorder %s99, %s102
      %p111 = scmp.eq.s32.totalorder %s21, 1
      %p112 = por %p110, %p111
      %p113 = scmp.ne.s32.totalorder %s102, %s103
      %p114 = scmp.eq.s32.totalorder %s21, 0
      %p115 = por %p113, %p114
      %p116 = scmp.ne.s32.totalorder %s102, %s103
      %p117 = scmp.eq.s32.totalorder %s22, 1
      %p118 = por %p116, %p117
      %p120 = scmp.ne.s32.totalorder %s103, %s119
      %p121 = scmp.eq.s32.totalorder %s22, 0
      %p122 = por %p120, %p121
      %p123 = scmp.le.s32.totalorder 1, %s16
      %p124 = scmp.lt.s32.totalorder %s16, 3
      %p125 = pnand %p123, %p124
      %p126 = pneg %p125
      // Predicated region
      $region9: #{tpu_custom_call.1} parent=5 // pred_check
        _
      $region10: #{tpu_custom_call.1} parent=5 // pred_check_branch
        %128 = sbr.rel (%p125) target = $region12
      $region11: #{tpu_custom_call.1} parent=5 // pred_region
        %s129 = ssub.s32 %s16, 1
        // Predicated region
        $region13: #{tpu_custom_call.1} parent=11 // pred_check
          %p130 = pneg %p37
        $region14: #{tpu_custom_call.1} parent=11 // pred_check_branch
          %132 = sbr.rel (%p130) target = $region16
        $region15: #{tpu_custom_call.1} parent=11 // pred_region
          %s134 = ssub.s32 192, 192
          %135 = vsyncadd [#allocation3], %s134
          %s136 = sshll.u32 [#allocation2], 4
          %s137 = int_to_ptr.vmem [resolvable:$true] %s136
          %142 = dma.hbm_to_vmem [thread:$0]  %s0, 192, %s137, [#allocation3], 64, 64, 4
        $region16: #{tpu_custom_call.1} parent=11 // pred_fallthru
          _
      $region12: #{tpu_custom_call.1} parent=5 // pred_fallthru
        _
      %p143 = scmp.lt.s32.totalorder %s16, 2
      // Predicated region
      $region17: #{tpu_custom_call.1} parent=5 // pred_check
        %p144 = pneg %p143
      $region18: #{tpu_custom_call.1} parent=5 // pred_check_branch
        %146 = sbr.rel (%p144) target = $region20
      $region19: #{tpu_custom_call.1} parent=5 // pred_region
        // Predicated region
        $region21: #{tpu_custom_call.1} parent=19 // pred_check
          %p147 = pneg %p57
        $region22: #{tpu_custom_call.1} parent=19 // pred_check_branch
          %149 = sbr.rel (%p147) target = $region24
        $region23: #{tpu_custom_call.1} parent=19 // pred_region
          %s150 = sand.u32 %s47, 1
          %s151 = scalar_lea.sflag [#allocation6], %s150
          %s152 = sand.u32 %s47, 1
          %s153 = smul.addr %s152, 20
          %s154 = scalar_lea.vmem [#allocation5], %s153
          %s156 = ssub.s32 320, 320
          %157 = vsyncadd %s151, %s156
          %s158 = smul.addr %s16, 64
          %s159 = scalar_lea.hbm %s1, %s158
          %s160 = sshll.u32 %s154, 4
          %s161 = int_to_ptr.vmem [resolvable:$true] %s160
          %166 = dma.hbm_to_vmem [thread:$0]  %s159, 320, %s161, %s151, 128, 64, 4
        $region24: #{tpu_custom_call.1} parent=19 // pred_fallthru
          _
        // Predicated region
        $region25: #{tpu_custom_call.1} parent=19 // pred_check
          %p167 = pneg %p83
        $region26: #{tpu_custom_call.1} parent=19 // pred_check_branch
          %169 = sbr.rel (%p167) target = $region28
        $region27: #{tpu_custom_call.1} parent=19 // pred_region
          %p170 = scmp.lt.s32.totalorder %s16, 1
          %s171 = scalar_select %p170, %s16, 1
          %s172 = scalar_lea.vmem %s2, %s171
        $region28: #{tpu_custom_call.1} parent=19 // pred_fallthru
          _
      $region20: #{tpu_custom_call.1} parent=5 // pred_fallthru
        _
      %p173 = scmp.le.s32.totalorder 1, %s16
      %p174 = scmp.lt.s32.totalorder %s16, 3
      %p175 = pnand %p173, %p174
      %p176 = pneg %p175
      // Predicated region
      $region29: #{tpu_custom_call.1} parent=5 // pred_check
        _
      $region30: #{tpu_custom_call.1} parent=5 // pred_check_branch
        %178 = sbr.rel (%p175) target = $region32
      $region31: #{tpu_custom_call.1} parent=5 // pred_region
        %s179 = ssub.s32 %s16, 1
        // Predicated region
        $region33: #{tpu_custom_call.1} parent=31 // pred_check
          %p180 = pneg %p37
        $region34: #{tpu_custom_call.1} parent=31 // pred_check_branch
          %182 = sbr.rel (%p180) target = $region36
        $region35: #{tpu_custom_call.1} parent=31 // pred_region
          %183 = dma.done [#allocation3], 192
        $region36: #{tpu_custom_call.1} parent=31 // pred_fallthru
          _
        %s184 = sand.u32 %s50, 1
        %s185 = scalar_lea.sflag [#allocation6], %s184
        %s186 = sand.u32 %s50, 1
        %s187 = smul.addr %s186, 20
        %s188 = scalar_lea.vmem [#allocation5], %s187
        // Predicated region
        $region37: #{tpu_custom_call.1} parent=31 // pred_check
          %p189 = pneg %p63
        $region38: #{tpu_custom_call.1} parent=31 // pred_check_branch
          %191 = sbr.rel (%p189) target = $region40
        $region39: #{tpu_custom_call.1} parent=31 // pred_region
          %192 = dma.done %s185, 320
        $region40: #{tpu_custom_call.1} parent=31 // pred_fallthru
          _
        %p193 = pneg %p37
        %p194 = pneg %p34
        %s195 = sand.u32 %s50, 1
        %s196 = scalar_lea.sflag [#allocation6], %s195
        %s197 = sand.u32 %s50, 1
        %s198 = smul.addr %s197, 20
        %s199 = scalar_lea.vmem [#allocation5], %s198
        %p200 = pneg %p63
        %p201 = pneg %p60
        %p202 = scmp.lt.s32.totalorder %s21, 1
        %s203 = scalar_select %p202, %s21, 1
        %s204 = scalar_lea.vmem %s2, %s203
        %p205 = pneg %p89
        %p206 = pneg %p86
        %p207 = pneg %p115
        %p208 = pneg %p112
        %s209 = sand.u32 %s102, 1
        %s210 = scalar_lea.sflag [#allocation4], %s209
        %s211 = sand.u32 %s102, 1
        %s212 = smul.addr %s211, 24
        %s213 = scalar_lea.vmem [#allocation7], %s212
        %p214 = scmp.lt.s32.totalorder %s21, 1
        %s215 = scalar_select %p214, %s21, 1
        %s216 = scalar_lea.vmem %s2, %s215
        %v218 = vld [vmem:[#allocation2] sm:$0xf]
        %v219 = vld [vmem:[#allocation2 + $0x4] sm:$0xf]
        %v220 = vld [vmem:[#allocation2 + $0x8] sm:$0xf]
        %v221 = vld [vmem:[%s188] sm:$0xf]
        %v222 = vld [vmem:[%s188 + $0x4] sm:$0xf]
        %v223 = vld [vmem:[%s188 + $0x8] sm:$0xf]
        %v224 = vld [vmem:[%s188 + $0xc] sm:$0xf]
        %v225 = vld [vmem:[%s188 + $0x10] sm:$0xf]
        %v226 = vld [vmem:[%s216] sm:$0x1]
        %v228 = vlaneseq
        %v229 = vshrl.u32 %v228, 7
        %v230 = vsub.s32 0, %v229
        %v231 = vrot.slane %v226, %v230
        %v236 = vunpack.c.l.b16 %v218
        %v237 = vunpack.c.l.b16 %v219
        %v238 = vunpack.c.l.b16 %v220
        %v239 = vpack.c.b16 %v237, %v236
        %v240 = vpack.c.b16 %v238, %v238
        %v246 = vunpack.c.l.b16 %v221
        %v247 = vunpack.c.l.b16 %v222
        %v248 = vunpack.c.l.b16 %v223
        %v249 = vunpack.c.l.b16 %v224
        %v250 = vunpack.c.l.b16 %v225
        %v251 = vpack.c.b16 %v247, %v246
        %v252 = vpack.c.b16 %v249, %v248
        %v253 = vpack.c.b16 %v250, %v250
        %vm256 = vcmask 326656
        %v258 = vsel %vm256, %v239, 0
        %v261 = vsel %vm256, %v240, 0
        %vm263 = vcmask 1043456
        %v265 = vsel %vm263, %v253, 0
        %267 = vmatprep.subr.bf16.mxu0 0
        %268 = vmatpush1.bf16.msra.mxu0 0
        %269 = vmatprep.subr.bf16.mxu0 0
        %270 = vmatpush1.bf16.msra.mxu0 0
        %271 = vmatprep.subr.bf16.mxu0 0
        %272 = vmatpush1.bf16.msra.mxu0 0
        %273 = vmatprep.subr.bf16.mxu0 0
        %274 = vmatpush1.bf16.msra.mxu0 0
        %275 = vmatprep.subr.bf16.mxu0 0
        %276 = vmatpush1.bf16.msra.mxu0 0
        %277 = vmatprep.subr.bf16.mxu0 0
        %278 = vmatpush1.bf16.msra.mxu0 %v265
        %279 = vmatprep.subr.bf16.mxu0 0
        %280 = vmatpush1.bf16.msra.mxu0 %v252
        %281 = vmatprep.subr.bf16.mxu0 0
        %282 = vmatpush1.bf16.msra.mxu0 %v251
        %283 = vmatprep.subr.bf16.mxu0 0
        %284 = vmatpush2.bf16.msra.mxu0 0
        %285 = vmatprep.subr.bf16.mxu0 0
        %286 = vmatpush2.bf16.msra.mxu0 0
        %287 = vmatprep.subr.bf16.mxu0 0
        %288 = vmatpush2.bf16.msra.mxu0 0
        %289 = vmatprep.subr.bf16.mxu0 0
        %290 = vmatpush2.bf16.msra.mxu0 0
        %291 = vmatprep.subr.bf16.mxu0 0
        %292 = vmatpush2.bf16.msra.mxu0 0
        %293 = vmatprep.subr.bf16.mxu0 0
        %294 = vmatpush2.bf16.msra.mxu0 0
        %295 = vmatprep.subr.bf16.mxu0 0
        %296 = vmatpush2.bf16.msra.mxu0 0
        %297 = vmatprep.subr.bf16.mxu0 0
        %298 = vmatpush2.bf16.msra.mxu0 0
        %299 = vmatprep.mubr.bf16.mxu0 0
        %300 = vmatmul.mubr.bf16.gmra.mxu0 %v258
        %v301 = vpop.f32.mrf.mxu0
        %v302 = vadd.f32 %v231, %v301
        %v303 = vpop.f32.mrf.mxu0
        %v304 = vpop.f32.mrf.mxu0
        %v305 = vadd.f32 %v231, %v304
        %v306 = vpop.f32.mrf.mxu0
        %307 = vmatprep.mubr.bf16.mxu0 0
        %308 = vmatmul.mubr.bf16.gmra.mxu0 %v261
        %v309 = vpop.f32.mrf.mxu0
        %v310 = vadd.f32 %v231, %v309
        %v311 = vpop.f32.mrf.mxu0
        %v312 = vpop.f32.mrf.mxu0
        %v313 = vpop.f32.mrf.mxu0
        %314 = vdwg.mxu0
        %v315 = vmax.f32 %v302, 0.0
        %v316 = vmax.f32 %v305, 0.0
        %v317 = vmax.f32 %v310, 0.0
        %318 = vst [vmem:[%s213] sm:$0xff] %v315
        %319 = vst [vmem:[%s213 + $0x8] sm:$0xff] %v316
        %320 = vst [vmem:[%s213 + $0x10] sm:$0xff] %v317
        %s321 = sand.u32 %s102, 1
        %s322 = scalar_lea.sflag [#allocation4], %s321
        %s323 = sand.u32 %s102, 1
        %s324 = smul.addr %s323, 24
        %s325 = scalar_lea.vmem [#allocation7], %s324
        // Predicated region
        $region41: #{tpu_custom_call.1} parent=31 // pred_check
          %p326 = pneg %p112
        $region42: #{tpu_custom_call.1} parent=31 // pred_check_branch
          %328 = sbr.rel (%p326) target = $region44
        $region43: #{tpu_custom_call.1} parent=31 // pred_region
          %s330 = ssub.s32 384, 384
          %331 = vsyncadd %s322, %s330
          %s332 = smul.addr %s21, 128
          %s333 = scalar_lea.hbm %s3, %s332
          %s334 = sshll.u32 %s325, 4
          %s335 = int_to_ptr.vmem [resolvable:$true] %s334
          %340 = dma.vmem_to_hbm [thread:$0]  %s335, 384, %s333, %s322, 128, 256, 8
        $region44: #{tpu_custom_call.1} parent=31 // pred_fallthru
          _
      $region32: #{tpu_custom_call.1} parent=5 // pred_fallthru
        _
      %p341 = scmp.le.s32.totalorder 2, %s16
      // Predicated region
      $region45: #{tpu_custom_call.1} parent=5 // pred_check
        %p342 = pneg %p341
      $region46: #{tpu_custom_call.1} parent=5 // pred_check_branch
        %344 = sbr.rel (%p342) target = $region48
      $region47: #{tpu_custom_call.1} parent=5 // pred_region
        %s345 = ssub.s32 %s16, 2
        // Predicated region
        $region49: #{tpu_custom_call.1} parent=47 // pred_check
          %p346 = pneg %p118
        $region50: #{tpu_custom_call.1} parent=47 // pred_check_branch
          %348 = sbr.rel (%p346) target = $region52
        $region51: #{tpu_custom_call.1} parent=47 // pred_region
          %s349 = sand.u32 %s103, 1
          %s350 = scalar_lea.sflag [#allocation4], %s349
          %s351 = sand.u32 %s103, 1
          %s352 = smul.addr %s351, 24
          %s353 = scalar_lea.vmem [#allocation7], %s352
          %354 = dma.done %s350, 384
        $region52: #{tpu_custom_call.1} parent=47 // pred_fallthru
          _
      $region48: #{tpu_custom_call.1} parent=5 // pred_fallthru
        _
    $region6: #{tpu_custom_call.1} parent=1 // loop_footer
      %s20 = sadd.s32 1, %s16
    $region7: #{tpu_custom_call.1} parent=1 // loop_footer_branch
      %15 = sbr.rel target = $region3
    $region8: #{tpu_custom_call.1} parent=1 // loop_exit
      _
    %355 = vsyncpa [#allocation3], 1
    %s356 = scalar_lea.sflag [#allocation3], 1
    %357 = vsyncpa %s356, 1
    %358 = vsyncpa [#allocation6], 1
    %s359 = scalar_lea.sflag [#allocation6], 1
    %360 = vsyncpa %s359, 1
    %361 = vsyncpa [#allocation4], 1
    %s362 = scalar_lea.sflag [#allocation4], 1
    %363 = vsyncpa %s362, 1

</llo_original>
